<compile_context>
chip_gen: v7x
topology: tpu7x:2x2x1
jax: 0.10.0
libtpu: 0.0.40
codegen_flags: <defaults>
</compile_context>

<pallas_src>
import functools
import math

import jax
import jax.numpy as jnp
from jax.experimental import pallas as pl
from jax.experimental.pallas import tpu as pltpu


def _round_up(x, m):
    return ((x + m - 1) // m) * m


def _tm_kernel(x_ref, w_ref, b_ref, o_ref):
    # x_ref: (TM, K), w_ref: (K, Npad), b_ref: (1, Npad), o_ref: (TM, Npad)
    acc = jnp.dot(x_ref[...], w_ref[...], preferred_element_type=jnp.float32)
    z = acc + b_ref[...]
    # Clamp keeps exp finite so the Newton refinement below never sees inf*0.
    z = jnp.clip(z, -30.0, 30.0)
    e = jnp.exp(-z)                          # EUP
    d = 1.0 + e
    r = pl.reciprocal(d, approx=True)        # EUP vrcp (free next to the exp)
    r = r * (2.0 - d * r)                    # one Newton step -> f32 accuracy
    o_ref[...] = r.astype(o_ref.dtype)


@functools.partial(jax.jit, static_argnames=("wout", "matmul_dtype"))
def transmission_matrix_forward(x, weight_t, bias, *, wout, matmul_dtype=None):
    """x: (B, C, Win, Win); weight_t: (Win*Win, Wout*Wout); bias: (Wout*Wout,).

    matmul_dtype: optional (e.g. jnp.bfloat16) for the MXU operands on
    v6e/v7x; accumulation and epilogue remain f32.
    """
    B, C, H, W = x.shape
    K = H * W
    N = wout * wout
    M = B * C
    N_pad = _round_up(N, 128)                # lane-dense output / weight columns

    x2d = x.reshape(M, K)
    w2d = weight_t
    if matmul_dtype is not None:
        x2d = x2d.astype(matmul_dtype)
        w2d = w2d.astype(matmul_dtype)
    w_pad = jnp.pad(w2d, ((0, 0), (0, N_pad - N)))
    b_pad = jnp.pad(bias.astype(jnp.float32), (0, N_pad - N)).reshape(1, N_pad)

    # Large row tile (MXU-friendly), but keep >=2 grid steps when M > 8 so the
    # "parallel" axis can actually split across cores; cap at 512 rows.
    TM = min(512, max(8, _round_up(pl.cdiv(M, 2), 8)))
    grid = (pl.cdiv(M, TM),)

    flops = 2 * M * K * N_pad
    bytes_accessed = (
        x2d.size * x2d.dtype.itemsize
        + w_pad.size * w_pad.dtype.itemsize
        + b_pad.size * b_pad.dtype.itemsize
        + M * N_pad * x.dtype.itemsize
    )

    out2d = pl.pallas_call(
        _tm_kernel,
        out_shape=jax.ShapeDtypeStruct((M, N_pad), x.dtype),
        grid_spec=pltpu.PrefetchScalarGridSpec(
            num_scalar_prefetch=0,
            grid=grid,
            in_specs=[
                pl.BlockSpec((TM, K), lambda i: (i, 0)),
                pl.BlockSpec((K, N_pad), lambda i: (0, 0)),
                pl.BlockSpec((1, N_pad), lambda i: (0, 0)),
            ],
            out_specs=pl.BlockSpec((TM, N_pad), lambda i: (i, 0)),
        ),
        compiler_params=pltpu.CompilerParams(
            dimension_semantics=("parallel",),
        ),
        cost_estimate=pl.CostEstimate(
            flops=flops,
            transcendentals=M * N_pad,
            bytes_accessed=bytes_accessed,
        ),
    )(x2d, w_pad, b_pad)

    return out2d[:, :N].reshape(B, C, wout, wout)


def init_params(key, win, wout, dtype=jnp.float32):
    """Matches nn.Linear default init: U(-1/sqrt(fan_in), 1/sqrt(fan_in))."""
    fan_in = win * win
    fan_out = wout * wout
    bound = 1.0 / math.sqrt(fan_in)
    kw, kb = jax.random.split(key)
    # PyTorch stores weight as (out, in); we keep the transposed (in, out) layout.
    weight_t = jax.random.uniform(kw, (fan_in, fan_out), dtype, -bound, bound)
    bias = jax.random.uniform(kb, (fan_out,), dtype, -bound, bound)
    return weight_t, bias


def reference_forward(x, weight_t, bias, wout):
    B, C, H, W = x.shape
    x2d = x.reshape(B, C, H * W)
    out = jax.nn.sigmoid(jnp.einsum("bck,kn->bcn", x2d, weight_t) + bias)
    return out.reshape(B, C, wout, wout)


if __name__ == "__main__":
    Win, Wout = 16, 8
    B, C = 2, 4

    key = jax.random.PRNGKey(0)
    kx, kp = jax.random.split(key)
    x = jax.random.normal(kx, (B, C, Win, Win), jnp.float32)
    weight_t, bias = init_params(kp, Win, Wout)

    ref = reference_forward(x, weight_t, bias, Wout)

    # f32 path (faithful to the PyTorch module's numerics).
    out = transmission_matrix_forward(x, weight_t, bias, wout=Wout)
    out = jax.block_until_ready(out)
    assert out.shape == (B, C, Wout, Wout), out.shape
    assert jnp.allclose(out, ref, atol=1e-5, rtol=1e-5), float(
        jnp.max(jnp.abs(out - ref))
    )

    # bf16-operand path (v6e/v7x MXU throughput); accumulation stays f32.
    out_bf16 = transmission_matrix_forward(
        x, weight_t, bias, wout=Wout, matmul_dtype=jnp.bfloat16
    )
    out_bf16 = jax.block_until_ready(out_bf16)
    assert out_bf16.shape == (B, C, Wout, Wout), out_bf16.shape
    assert jnp.allclose(out_bf16, ref, atol=2e-2, rtol=2e-2), float(
        jnp.max(jnp.abs(out_bf16 - ref))
    )

    print("KERNEL_OK")
</pallas_src>

<mosaic_0001>
module attributes {stable_mosaic.version = 11 : i64} {
  func.func @_tm_kernel(%arg0: i32, %arg1: memref<8x256xf32, #tpu.memory_space<vmem>>, %arg2: memref<256x128xf32, #tpu.memory_space<vmem>>, %arg3: memref<1x128xf32, #tpu.memory_space<vmem>>, %arg4: memref<8x128xf32, #tpu.memory_space<vmem>>) attributes {dimension_semantics = [#tpu.dimension_semantics<parallel>], iteration_bounds = array<i64: 1>, scalar_prefetch = 0 : i64, scratch_operands = 0 : i64, tpu.core_type = #tpu.core_type<tc>, window_params = [{transform_indices = @transform_0, window_bounds = array<i64: 8, 256>}, {pipeline_mode = #tpu.pipeline_mode<synchronous>, transform_indices = @transform_1, window_bounds = array<i64: 256, 128>}, {pipeline_mode = #tpu.pipeline_mode<synchronous>, transform_indices = @transform_2, window_bounds = array<i64: 1, 128>}, {transform_indices = @transform_3, window_bounds = array<i64: 8, 128>}]} {
    %c0 = arith.constant 0 : index
    %c0_0 = arith.constant 0 : index
    %0 = vector.load %arg1[%c0, %c0_0] : memref<8x256xf32, #tpu.memory_space<vmem>>, vector<8x256xf32>
    %c0_1 = arith.constant 0 : index
    %c0_2 = arith.constant 0 : index
    %1 = vector.load %arg2[%c0_1, %c0_2] : memref<256x128xf32, #tpu.memory_space<vmem>>, vector<256x128xf32>
    %cst = arith.constant dense<0.000000e+00> : vector<8x128xf32>
    %2 = tpu.matmul %0, %1, %cst {dimension_numbers = #tpu.dot_dimension_numbers<[1], [0], [0], [1], [0, 0, 1, 1], [], []>} : vector<8x256xf32>, vector<256x128xf32>, vector<8x128xf32> -> vector<8x128xf32>
    %c0_3 = arith.constant 0 : index
    %c0_4 = arith.constant 0 : index
    %3 = vector.load %arg3[%c0_3, %c0_4] : memref<1x128xf32, #tpu.memory_space<vmem>>, vector<1x128xf32>
    %4 = vector.broadcast %3 : vector<1x128xf32> to vector<8x128xf32>
    %5 = arith.addf %2, %4 : vector<8x128xf32>
    %cst_5 = arith.constant -3.000000e+01 : f32
    %cst_6 = arith.constant 3.000000e+01 : f32
    %6 = vector.broadcast %cst_5 : f32 to vector<8x128xf32>
    %7 = arith.maximumf %6, %5 : vector<8x128xf32>
    %8 = vector.broadcast %cst_6 : f32 to vector<8x128xf32>
    %9 = arith.minimumf %8, %7 : vector<8x128xf32>
    %cst_7 = arith.constant 0.000000e+00 : f32
    %10 = vector.broadcast %cst_7 : f32 to vector<8x128xf32>
    %11 = arith.subf %10, %9 : vector<8x128xf32>
    %12 = math.exp %11 : vector<8x128xf32>
    %cst_8 = arith.constant 1.000000e+00 : f32
    %13 = vector.broadcast %cst_8 : f32 to vector<8x128xf32>
    %14 = arith.addf %13, %12 : vector<8x128xf32>
    %15 = tpu.reciprocal %14 {approx = true} : vector<8x128xf32> -> vector<8x128xf32>
    %16 = arith.mulf %14, %15 : vector<8x128xf32>
    %cst_9 = arith.constant 2.000000e+00 : f32
    %17 = vector.broadcast %cst_9 : f32 to vector<8x128xf32>
    %18 = arith.subf %17, %16 : vector<8x128xf32>
    %19 = arith.mulf %15, %18 : vector<8x128xf32>
    %c0_10 = arith.constant 0 : index
    %c0_11 = arith.constant 0 : index
    %20 = vector.load %arg4[%c0_10, %c0_11] : memref<8x128xf32, #tpu.memory_space<vmem>>, vector<8x128xf32>
    tpu.vector_store %arg4[%c0_10, %c0_11], %19 {strides = array<i32>} : memref<8x128xf32, #tpu.memory_space<vmem>>, vector<8x128xf32>,
    return
  }
  func.func @transform_0(%arg0: i32) -> (i32, i32) {
    %c0_i32 = arith.constant 0 : i32
    %c0_i32_0 = arith.constant 0 : i32
    return %arg0, %c0_i32 : i32, i32
  }
  func.func @transform_1(%arg0: i32) -> (i32, i32) {
    %c0_i32 = arith.constant 0 : i32
    %c0_i32_0 = arith.constant 0 : i32
    %c0_i32_1 = arith.constant 0 : i32
    return %c0_i32, %c0_i32_0 : i32, i32
  }
  func.func @transform_2(%arg0: i32) -> (i32, i32) {
    %c0_i32 = arith.constant 0 : i32
    %c0_i32_0 = arith.constant 0 : i32
    %c0_i32_1 = arith.constant 0 : i32
    return %c0_i32, %c0_i32_0 : i32, i32
  }
  func.func @transform_3(%arg0: i32) -> (i32, i32) {
    %c0_i32 = arith.constant 0 : i32
    %c0_i32_0 = arith.constant 0 : i32
    return %arg0, %c0_i32 : i32, i32
  }
}

</mosaic_0001>

<llo_original>
// kernel: transmission_matrix_forward.1
$region0: #{transmission_matrix_forward.1}
  #allocation0 [shape = 'u32[]', space=smem, size = 0x4, offset = 0x4, fixed_abs, tag = 'smem constant byte address 0x4 - core index']
  #allocation1 [shape = 'u32[144,128]{1,0:T(1,128)}', space=vmem, size = 0x12000, scoped, tag = 'internal scratch']
  %s0 = inlined_call_operand.vmem [shape: f32[8,256], index: 0, kind: input, shape index: {}]
  %s1 = inlined_call_operand.vmem [shape: f32[256,128], index: 1, kind: input, shape index: {}]
  %s2 = inlined_call_operand.vmem [shape: f32[1,128], index: 2, kind: input, shape index: {}]
  %s3 = inlined_call_operand.vmem [shape: f32[8,128], index: 3, kind: output, shape index: {}]
  %s4 = sld [smem:[#allocation0]]
  $region22: #{transmission_matrix_forward.1} parent=0
    _
  %s6 = ssub.s32 1, %s4
  %s7 = scalar_select 0, %s6, %s4
  // Predicated region
  $region2: #{transmission_matrix_forward.1} parent=0 // pred_check
    _
  $region3: #{transmission_matrix_forward.1} parent=0 // pred_check_branch
    %9 = sbr.rel (0) target = $region5
  $region4: #{transmission_matrix_forward.1} parent=0 // pred_region
    _
  $region5: #{transmission_matrix_forward.1} parent=0 // pred_fallthru
    _
  // Predicated region
  $region6: #{transmission_matrix_forward.1} parent=0 // pred_check
    _
  $region7: #{transmission_matrix_forward.1} parent=0 // pred_check_branch
    %11 = sbr.rel (0) target = $region9
  $region8: #{transmission_matrix_forward.1} parent=0 // pred_region
    _
  $region9: #{transmission_matrix_forward.1} parent=0 // pred_fallthru
    _
  // Predicated region
  $region10: #{transmission_matrix_forward.1} parent=0 // pred_check
    _
  $region11: #{transmission_matrix_forward.1} parent=0 // pred_check_branch
    %13 = sbr.rel (0) target = $region13
  $region12: #{transmission_matrix_forward.1} parent=0 // pred_region
    _
  $region13: #{transmission_matrix_forward.1} parent=0 // pred_fallthru
    _
  %v14 = vld [vmem:[%s0] sm:$0xff]
  %v15 = vld [vmem:[%s0 + $0x8] sm:$0xff]
  %v16 = vld [vmem:[%s1] sm:$0xff]
  %v17 = vld [vmem:[%s1 + $0x8] sm:$0xff]
  %v18 = vld [vmem:[%s1 + $0x10] sm:$0xff]
  %v19 = vld [vmem:[%s1 + $0x18] sm:$0xff]
  %v20 = vld [vmem:[%s1 + $0x20] sm:$0xff]
  %v21 = vld [vmem:[%s1 + $0x28] sm:$0xff]
  %v22 = vld [vmem:[%s1 + $0x30] sm:$0xff]
  %v23 = vld [vmem:[%s1 + $0x38] sm:$0xff]
  %v24 = vld [vmem:[%s1 + $0x40] sm:$0xff]
  %v25 = vld [vmem:[%s1 + $0x48] sm:$0xff]
  %v26 = vld [vmem:[%s1 + $0x50] sm:$0xff]
  %v27 = vld [vmem:[%s1 + $0x58] sm:$0xff]
  %v28 = vld [vmem:[%s1 + $0x60] sm:$0xff]
  %v29 = vld [vmem:[%s1 + $0x68] sm:$0xff]
  %v30 = vld [vmem:[%s1 + $0x70] sm:$0xff]
  %v31 = vld [vmem:[%s1 + $0x78] sm:$0xff]
  %v32 = vld [vmem:[%s1 + $0x80] sm:$0xff]
  %v33 = vld [vmem:[%s1 + $0x88] sm:$0xff]
  %v34 = vld [vmem:[%s1 + $0x90] sm:$0xff]
  %v35 = vld [vmem:[%s1 + $0x98] sm:$0xff]
  %v36 = vld [vmem:[%s1 + $0xa0] sm:$0xff]
  %v37 = vld [vmem:[%s1 + $0xa8] sm:$0xff]
  %v38 = vld [vmem:[%s1 + $0xb0] sm:$0xff]
  %v39 = vld [vmem:[%s1 + $0xb8] sm:$0xff]
  %v40 = vld [vmem:[%s1 + $0xc0] sm:$0xff]
  %v41 = vld [vmem:[%s1 + $0xc8] sm:$0xff]
  %v42 = vld [vmem:[%s1 + $0xd0] sm:$0xff]
  %v43 = vld [vmem:[%s1 + $0xd8] sm:$0xff]
  %v44 = vld [vmem:[%s1 + $0xe0] sm:$0xff]
  %v45 = vld [vmem:[%s1 + $0xe8] sm:$0xff]
  %v46 = vld [vmem:[%s1 + $0xf0] sm:$0xff]
  %v47 = vld [vmem:[%s1 + $0xf8] sm:$0xff]
  %v48 = vld [vmem:[%s2] sm:$0x1]
  %v50 = vlaneseq
  %v51 = vshrl.u32 %v50, 7
  %v52 = vsub.s32 0, %v51
  %v53 = vrot.slane %v48, %v52
  %55 = vmatprep.subr.mxu0 0.0
  %56 = vmatpush1.msra.mxu0 %v16
  %57 = vmatprep.subr.mxu0 0.0
  %58 = vmatpush1.msra.mxu0 %v17
  %59 = vmatprep.subr.mxu0 0.0
  %60 = vmatpush1.msra.mxu0 %v18
  %61 = vmatprep.subr.mxu0 0.0
  %62 = vmatpush1.msra.mxu0 %v19
  %63 = vmatprep.subr.mxu0 0.0
  %64 = vmatpush1.msra.mxu0 %v20
  %65 = vmatprep.subr.mxu0 0.0
  %66 = vmatpush1.msra.mxu0 %v21
  %67 = vmatprep.subr.mxu0 0.0
  %68 = vmatpush1.msra.mxu0 %v22
  %69 = vmatprep.subr.mxu0 0.0
  %70 = vmatpush1.msra.mxu0 %v23
  %71 = vmatprep.subr.mxu0 0.0
  %72 = vmatpush1.msra.mxu0 %v24
  %73 = vmatprep.subr.mxu0 0.0
  %74 = vmatpush1.msra.mxu0 %v25
  %75 = vmatprep.subr.mxu0 0.0
  %76 = vmatpush1.msra.mxu0 %v26
  %77 = vmatprep.subr.mxu0 0.0
  %78 = vmatpush1.msra.mxu0 %v27
  %79 = vmatprep.subr.mxu0 0.0
  %80 = vmatpush1.msra.mxu0 %v28
  %81 = vmatprep.subr.mxu0 0.0
  %82 = vmatpush1.msra.mxu0 %v29
  %83 = vmatprep.subr.mxu0 0.0
  %84 = vmatpush1.msra.mxu0 %v30
  %85 = vmatprep.subr.mxu0 0.0
  %86 = vmatpush1.msra.mxu0 %v31
  %87 = vmatprep.subr.mxu0 0.0
  %88 = vmatpush1.msra.mxu0 %v32
  %89 = vmatprep.subr.mxu0 0.0
  %90 = vmatpush1.msra.mxu0 %v33
  %91 = vmatprep.subr.mxu0 0.0
  %92 = vmatpush1.msra.mxu0 %v34
  %93 = vmatprep.subr.mxu0 0.0
  %94 = vmatpush1.msra.mxu0 %v35
  %95 = vmatprep.subr.mxu0 0.0
  %96 = vmatpush1.msra.mxu0 %v36
  %97 = vmatprep.subr.mxu0 0.0
  %98 = vmatpush1.msra.mxu0 %v37
  %99 = vmatprep.subr.mxu0 0.0
  %100 = vmatpush1.msra.mxu0 %v38
  %101 = vmatprep.subr.mxu0 0.0
  %102 = vmatpush1.msra.mxu0 %v39
  %103 = vmatprep.subr.mxu0 0.0
  %104 = vmatpush1.msra.mxu0 %v40
  %105 = vmatprep.subr.mxu0 0.0
  %106 = vmatpush1.msra.mxu0 %v41
  %107 = vmatprep.subr.mxu0 0.0
  %108 = vmatpush1.msra.mxu0 %v42
  %109 = vmatprep.subr.mxu0 0.0
  %110 = vmatpush1.msra.mxu0 %v43
  %111 = vmatprep.subr.mxu0 0.0
  %112 = vmatpush1.msra.mxu0 %v44
  %113 = vmatprep.subr.mxu0 0.0
  %114 = vmatpush1.msra.mxu0 %v45
  %115 = vmatprep.subr.mxu0 0.0
  %116 = vmatpush1.msra.mxu0 %v46
  %117 = vmatprep.subr.mxu0 0.0
  %118 = vmatpush1.msra.mxu0 %v47
  %119 = vmatprep.mubr.f32.mxu0 %v15
  %120 = vmatmul.mubr.f32.gmra.mrb[0].mxu0 %v14
  %v121 = vpop.f32.mrb[0].mxu0
  %v122 = vadd.f32 %v53, %v121
  %v123 = vpop.f32.mrb[0].mxu0
  %124 = vdwg.mxu0
  %v125 = vmax.f32 %v122, -30.0
  %v126 = vmin.f32 %v125, 30.0
  %v127 = vsub.f32 0.0, %v126
  %v128 = vmul.f32 %v127, 1.442695
  %v129 = vpow.pop %v128
  %v130 = vadd.f32 %v129, 1.0
  %v131 = vrcp.pop %v130
  %v132 = vmul.f32 %v130, %v131
  %v133 = vsub.f32 2.0, %v132
  %v134 = vmul.f32 %v131, %v133
  %135 = vst [vmem:[%s3] sm:$0xff] %v134
  // Predicated region
  $region14: #{transmission_matrix_forward.1} parent=0 // pred_check
    _
  $region15: #{transmission_matrix_forward.1} parent=0 // pred_check_branch
    %137 = sbr.rel (0) target = $region17
  $region16: #{transmission_matrix_forward.1} parent=0 // pred_region
    _
  $region17: #{transmission_matrix_forward.1} parent=0 // pred_fallthru
    _
  // Predicated region
  $region18: #{transmission_matrix_forward.1} parent=0 // pred_check
    _
  $region19: #{transmission_matrix_forward.1} parent=0 // pred_check_branch
    %139 = sbr.rel (0) target = $region21
  $region20: #{transmission_matrix_forward.1} parent=0 // pred_region
    _
  $region21: #{transmission_matrix_forward.1} parent=0 // pred_fallthru
    _

</llo_original>
